<compile_context>
chip_gen: v6e
topology: v6e:2x2x1
jax: 0.10.0
libtpu: 0.0.40
codegen_flags: <defaults>
</compile_context>

<pallas_src>
import jax
import jax.numpy as jnp
from jax.experimental import pallas as pl
from jax.experimental.pallas import tpu as pltpu


def _perm_equi2_kernel(x_ref, gw_ref, gb_ref, lw_ref, o_ref):
    # x_ref:  (TB, Np, D_in)    TB sets, full (sublane-padded) set dim resident
    # gw_ref: (D_in, D_out_f)   Gamma weight, pre-transposed
    # gb_ref: (1, D_out_f)      Gamma bias
    # lw_ref: (D_in, D_out_f)   Lambda weight, pre-transposed
    # o_ref:  (TB, Np, D_out_f)
    tb, n, d_in = x_ref.shape
    d_out = o_ref.shape[-1]

    x = x_ref[...]                                           # (TB, Np, D_in)

    # Lambda branch: per-set sum in D_in space (cheap), one batched matmul.
    xm = jnp.sum(x, axis=1)                                  # (TB, D_in)
    lam = jnp.dot(xm, lw_ref[...],
                  preferred_element_type=jnp.float32)        # (TB, D_out_f)

    # Reassociated epilogue: fold bias and -lam into one small per-set term.
    c = gb_ref[...].astype(jnp.float32) - lam                # (TB, D_out_f)

    # Gamma branch: one big flattened MXU matmul.  Np is a sublane multiple
    # (guaranteed by the wrapper) so the reshape is layout-clean — no relayout,
    # no per-set tiny-matmul einsum fallback.
    g = jnp.dot(x.reshape(tb * n, d_in), gw_ref[...],
                preferred_element_type=jnp.float32)          # (TB*Np, D_out_f)
    out = g.reshape(tb, n, d_out) + c[:, None, :]

    o_ref[...] = out.astype(o_ref.dtype)


def _round_up(v, m):
    return -(-v // m) * m


def perm_equi2_mean(x, gamma_w, gamma_b, lambda_w, *, target_rows=1024):
    """PermEqui2_mean forward.

    x: (B, N, D_in); gamma_w/lambda_w: (D_out, D_in); gamma_b: (D_out,).
    """
    B, N, D_in = x.shape
    D_out = gamma_w.shape[0]
    dtype = x.dtype
    itemsize = jnp.dtype(dtype).itemsize

    # dtype-aware sublane multiple: f32 -> 8, bf16 -> 16, int8/fp8 -> 32.
    sub = max(8, 32 // itemsize)
    N_p = _round_up(N, sub)

    # Conditional lane padding of the output feature dim: only pad to 128 when
    # the pad fraction is small; otherwise keep the true D_out (full-dim block
    # is legal, stores are masked) to avoid HBM write amplification + a slice.
    d128 = _round_up(D_out, 128)
    pad_frac = (d128 - D_out) / d128
    D_out_f = d128 if pad_frac <= 0.25 else D_out

    gw_t = jnp.transpose(gamma_w)             # (D_in, D_out)
    lw_t = jnp.transpose(lambda_w)            # (D_in, D_out)
    gb = gamma_b.reshape(1, D_out)            # (1, D_out)
    if D_out_f != D_out:
        pad = D_out_f - D_out
        gw_t = jnp.pad(gw_t, ((0, 0), (0, pad)))
        lw_t = jnp.pad(lw_t, ((0, 0), (0, pad)))
        gb = jnp.pad(gb, ((0, 0), (0, pad)))

    # Pad the set dim to the sublane multiple (zero rows don't change the sum).
    x_p = x if N_p == N else jnp.pad(x, ((0, 0), (0, N_p - N), (0, 0)))

    # ----- VMEM-aware choice of TB (sets per grid step) -----------------------
    try:
        vmem_cap = int(pltpu.get_tpu_info().vmem_capacity_bytes)
    except Exception:
        vmem_cap = 64 * 1024 * 1024           # conservative default (v7x per-TC)
    vmem_limit = min(int(0.75 * vmem_cap), 96 * 1024 * 1024)
    block_budget = int(0.6 * vmem_limit)

    def _block_bytes(t):
        x_blk = 2 * t * N_p * D_in * itemsize             # double-buffered input
        o_blk = 2 * t * N_p * D_out_f * itemsize          # double-buffered output
        w_blk = (2 * D_in + 1) * D_out_f * itemsize       # single-buffered weights + bias
        interm = 2 * t * N_p * D_out_f * 4 \
               + t * (D_in + 2 * D_out_f) * 4             # f32 g/out + xm/lam/c
        return x_blk + o_blk + w_blk + interm

    tb = max(1, target_rows // max(N_p, 1))
    tb = min(tb, B)
    if B >= 2:
        # Keep the grid at >= 2 steps so both v7x TensorCores (and megacore on
        # v5e/v6e) get work on the "parallel" batch axis.
        tb = min(tb, -(-B // 2))
    while tb > 1 and _block_bytes(tb) > block_budget:
        tb //= 2
    # TODO(synk): if even tb=1 overflows the budget, switch to N-tiling with a
    # precomputed per-set correction (see header comment).

    grid = (pl.cdiv(B, tb),)                  # non-divisible grid: no batch pad copy

    _CompilerParams = getattr(pltpu, "CompilerParams", None)
    if _CompilerParams is None:               # older-jax name fallback
        _CompilerParams = pltpu.TPUCompilerParams

    def _run(single_buffer_weights):
        const_kw = {}
        if single_buffer_weights:
            # Grid-invariant operands: single buffer is enough (never re-fetched).
            const_kw = dict(pipeline_mode=pl.Buffered(1))
        in_specs = [
            pl.BlockSpec((tb, N_p, D_in), lambda b: (b, 0, 0)),
            pl.BlockSpec((D_in, D_out_f), lambda b: (0, 0), **const_kw),
            pl.BlockSpec((1, D_out_f), lambda b: (0, 0), **const_kw),
            pl.BlockSpec((D_in, D_out_f), lambda b: (0, 0), **const_kw),
        ]
        return pl.pallas_call(
            _perm_equi2_kernel,
            out_shape=jax.ShapeDtypeStruct((B, N_p, D_out_f), dtype),
            grid=grid,
            in_specs=in_specs,
            out_specs=pl.BlockSpec((tb, N_p, D_out_f), lambda b: (b, 0, 0)),
            compiler_params=_CompilerParams(
                dimension_semantics=("parallel",),
                vmem_limit_bytes=vmem_limit,
            ),
        )(x_p, gw_t, gb, lw_t)

    try:
        out = _run(True)
    except Exception:
        # pl.Buffered(1) unsupported on this jax version -> default double-buffering.
        out = _run(False)

    if N_p != N or D_out_f != D_out:
        out = out[:, :N, :D_out]
    return out


def perm_equi2_mean_ref(x, gamma_w, gamma_b, lambda_w):
    xm = jnp.sum(x, axis=1, keepdims=True)    # the spec module uses sum(1), not mean
    xm = xm @ lambda_w.T                      # (B, 1, D_out)
    g = x @ gamma_w.T + gamma_b               # (B, N, D_out)
    return g - xm


if __name__ == "__main__":
    def make_inputs(key, B, N, D_in, D_out):
        kx, kgw, kgb, klw = jax.random.split(key, 4)
        xx = jax.random.normal(kx, (B, N, D_in), dtype=jnp.float32)
        bound = 1.0 / (D_in ** 0.5)
        gw = jax.random.uniform(kgw, (D_out, D_in), jnp.float32, -bound, bound)
        gb = jax.random.uniform(kgb, (D_out,), jnp.float32, -bound, bound)
        lw = jax.random.uniform(klw, (D_out, D_in), jnp.float32, -bound, bound)
        return xx, gw, gb, lw

    key = jax.random.PRNGKey(0)
    k1, k2 = jax.random.split(key)

    # Case 1: small canonical shape (no padding anywhere, grid of 2 steps).
    x, gw, gb_, lw = make_inputs(k1, B=2, N=8, D_in=32, D_out=32)
    out = jax.block_until_ready(perm_equi2_mean(x, gw, gb_, lw))
    ref = perm_equi2_mean_ref(x, gw, gb_, lw)
    assert out.shape == ref.shape
    assert jnp.allclose(out, ref, atol=1e-5, rtol=1e-5), "mismatch vs reference (case 1)"

    # Case 2: odd shapes — exercises N sublane padding, no D_out padding, and
    # the partial final batch block of the non-divisible grid.
    x, gw, gb_, lw = make_inputs(k2, B=3, N=5, D_in=16, D_out=24)
    out = jax.block_until_ready(perm_equi2_mean(x, gw, gb_, lw))
    ref = perm_equi2_mean_ref(x, gw, gb_, lw)
    assert out.shape == ref.shape
    assert jnp.allclose(out, ref, atol=1e-5, rtol=1e-5), "mismatch vs reference (case 2)"

    print("KERNEL_OK")
</pallas_src>

<mosaic_0001>
module attributes {stable_mosaic.version = 11 : i64} {
  func.func @_perm_equi2_kernel(%arg0: i32, %arg1: memref<1x8x32xf32, #tpu.memory_space<vmem>>, %arg2: memref<32x32xf32, #tpu.memory_space<vmem>>, %arg3: memref<1x32xf32, #tpu.memory_space<vmem>>, %arg4: memref<32x32xf32, #tpu.memory_space<vmem>>, %arg5: memref<1x8x32xf32, #tpu.memory_space<vmem>>) attributes {dimension_semantics = [#tpu.dimension_semantics<parallel>], iteration_bounds = array<i64: 2>, scalar_prefetch = 0 : i64, scratch_operands = 0 : i64, tpu.core_type = #tpu.core_type<tc>, window_params = [{transform_indices = @transform_0, window_bounds = array<i64: 1, 8, 32>}, {pipeline_mode = #tpu.pipeline_mode<synchronous>, transform_indices = @transform_1, window_bounds = array<i64: 32, 32>}, {pipeline_mode = #tpu.pipeline_mode<synchronous>, transform_indices = @transform_2, window_bounds = array<i64: 1, 32>}, {pipeline_mode = #tpu.pipeline_mode<synchronous>, transform_indices = @transform_3, window_bounds = array<i64: 32, 32>}, {transform_indices = @transform_4, window_bounds = array<i64: 1, 8, 32>}]} {
    %c0 = arith.constant 0 : index
    %c0_0 = arith.constant 0 : index
    %c0_1 = arith.constant 0 : index
    %0 = vector.load %arg1[%c0, %c0_0, %c0_1] : memref<1x8x32xf32, #tpu.memory_space<vmem>>, vector<1x8x32xf32>
    %cst = arith.constant dense<0.000000e+00> : vector<1x32xf32>
    %1 = vector.multi_reduction <add>, %0, %cst [1] : vector<1x8x32xf32> to vector<1x32xf32>
    %c0_2 = arith.constant 0 : index
    %c0_3 = arith.constant 0 : index
    %2 = vector.load %arg4[%c0_2, %c0_3] : memref<32x32xf32, #tpu.memory_space<vmem>>, vector<32x32xf32>
    %cst_4 = arith.constant dense<0.000000e+00> : vector<1x32xf32>
    %3 = tpu.matmul %1, %2, %cst_4 {dimension_numbers = #tpu.dot_dimension_numbers<[1], [0], [0], [1], [0, 0, 1, 1], [], []>} : vector<1x32xf32>, vector<32x32xf32>, vector<1x32xf32> -> vector<1x32xf32>
    %c0_5 = arith.constant 0 : index
    %c0_6 = arith.constant 0 : index
    %4 = vector.load %arg3[%c0_5, %c0_6] : memref<1x32xf32, #tpu.memory_space<vmem>>, vector<1x32xf32>
    %5 = arith.subf %4, %3 : vector<1x32xf32>
    %6 = vector.shape_cast %0 : vector<1x8x32xf32> to vector<8x32xf32>
    %c0_7 = arith.constant 0 : index
    %c0_8 = arith.constant 0 : index
    %7 = vector.load %arg2[%c0_7, %c0_8] : memref<32x32xf32, #tpu.memory_space<vmem>>, vector<32x32xf32>
    %cst_9 = arith.constant dense<0.000000e+00> : vector<8x32xf32>
    %8 = tpu.matmul %6, %7, %cst_9 {dimension_numbers = #tpu.dot_dimension_numbers<[1], [0], [0], [1], [0, 0, 1, 1], [], []>} : vector<8x32xf32>, vector<32x32xf32>, vector<8x32xf32> -> vector<8x32xf32>
    %9 = vector.shape_cast %8 : vector<8x32xf32> to vector<1x8x32xf32>
    %10 = vector.shape_cast %5 : vector<1x32xf32> to vector<1x1x32xf32>
    %11 = vector.broadcast %10 : vector<1x1x32xf32> to vector<1x8x32xf32>
    %12 = arith.addf %9, %11 : vector<1x8x32xf32>
    %c0_10 = arith.constant 0 : index
    %c0_11 = arith.constant 0 : index
    %c0_12 = arith.constant 0 : index
    %13 = vector.load %arg5[%c0_10, %c0_11, %c0_12] : memref<1x8x32xf32, #tpu.memory_space<vmem>>, vector<1x8x32xf32>
    tpu.vector_store %arg5[%c0_10, %c0_11, %c0_12], %12 {strides = array<i32>} : memref<1x8x32xf32, #tpu.memory_space<vmem>>, vector<1x8x32xf32>,
    return
  }
  func.func @transform_0(%arg0: i32) -> (i32, i32, i32) {
    %c0_i32 = arith.constant 0 : i32
    %c0_i32_0 = arith.constant 0 : i32
    %c0_i32_1 = arith.constant 0 : i32
    return %arg0, %c0_i32, %c0_i32_0 : i32, i32, i32
  }
  func.func @transform_1(%arg0: i32) -> (i32, i32) {
    %c0_i32 = arith.constant 0 : i32
    %c0_i32_0 = arith.constant 0 : i32
    %c0_i32_1 = arith.constant 0 : i32
    return %c0_i32, %c0_i32_0 : i32, i32
  }
  func.func @transform_2(%arg0: i32) -> (i32, i32) {
    %c0_i32 = arith.constant 0 : i32
    %c0_i32_0 = arith.constant 0 : i32
    %c0_i32_1 = arith.constant 0 : i32
    return %c0_i32, %c0_i32_0 : i32, i32
  }
  func.func @transform_3(%arg0: i32) -> (i32, i32) {
    %c0_i32 = arith.constant 0 : i32
    %c0_i32_0 = arith.constant 0 : i32
    %c0_i32_1 = arith.constant 0 : i32
    return %c0_i32, %c0_i32_0 : i32, i32
  }
  func.func @transform_4(%arg0: i32) -> (i32, i32, i32) {
    %c0_i32 = arith.constant 0 : i32
    %c0_i32_0 = arith.constant 0 : i32
    %c0_i32_1 = arith.constant 0 : i32
    return %arg0, %c0_i32, %c0_i32_0 : i32, i32, i32
  }
}

module attributes {stable_mosaic.version = 11 : i64} {
  func.func @_perm_equi2_kernel(%arg0: i32, %arg1: memref<1x8x32xf32, #tpu.memory_space<vmem>>, %arg2: memref<32x32xf32, #tpu.memory_space<vmem>>, %arg3: memref<1x32xf32, #tpu.memory_space<vmem>>, %arg4: memref<32x32xf32, #tpu.memory_space<vmem>>, %arg5: memref<1x8x32xf32, #tpu.memory_space<vmem>>) attributes {dimension_semantics = [#tpu.dimension_semantics<parallel>], iteration_bounds = array<i64: 2>, scalar_prefetch = 0 : i64, scratch_operands = 0 : i64, tpu.core_type = #tpu.core_type<tc>, window_params = [{transform_indices = @transform_0, window_bounds = array<i64: 1, 8, 32>}, {pipeline_mode = #tpu.pipeline_mode<synchronous>, transform_indices = @transform_1, window_bounds = array<i64: 32, 32>}, {pipeline_mode = #tpu.pipeline_mode<synchronous>, transform_indices = @transform_2, window_bounds = array<i64: 1, 32>}, {pipeline_mode = #tpu.pipeline_mode<synchronous>, transform_indices = @transform_3, window_bounds = array<i64: 32, 32>}, {transform_indices = @transform_4, window_bounds = array<i64: 1, 8, 32>}]} {
    %c0 = arith.constant 0 : index
    %c0_0 = arith.constant 0 : index
    %c0_1 = arith.constant 0 : index
    %0 = vector.load %arg1[%c0, %c0_0, %c0_1] : memref<1x8x32xf32, #tpu.memory_space<vmem>>, vector<1x8x32xf32>
    %cst = arith.constant dense<0.000000e+00> : vector<1x32xf32>
    %1 = vector.multi_reduction <add>, %0, %cst [1] : vector<1x8x32xf32> to vector<1x32xf32>
    %c0_2 = arith.constant 0 : index
    %c0_3 = arith.constant 0 : index
    %2 = vector.load %arg4[%c0_2, %c0_3] : memref<32x32xf32, #tpu.memory_space<vmem>>, vector<32x32xf32>
    %cst_4 = arith.constant dense<0.000000e+00> : vector<1x32xf32>
    %3 = tpu.matmul %1, %2, %cst_4 {dimension_numbers = #tpu.dot_dimension_numbers<[1], [0], [0], [1], [0, 0, 1, 1], [], []>} : vector<1x32xf32>, vector<32x32xf32>, vector<1x32xf32> -> vector<1x32xf32>
    %c0_5 = arith.constant 0 : index
    %c0_6 = arith.constant 0 : index
    %4 = vector.load %arg3[%c0_5, %c0_6] : memref<1x32xf32, #tpu.memory_space<vmem>>, vector<1x32xf32>
    %5 = arith.subf %4, %3 : vector<1x32xf32>
    %6 = vector.shape_cast %0 : vector<1x8x32xf32> to vector<8x32xf32>
    %c0_7 = arith.constant 0 : index
    %c0_8 = arith.constant 0 : index
    %7 = vector.load %arg2[%c0_7, %c0_8] : memref<32x32xf32, #tpu.memory_space<vmem>>, vector<32x32xf32>
    %cst_9 = arith.constant dense<0.000000e+00> : vector<8x32xf32>
    %8 = tpu.matmul %6, %7, %cst_9 {dimension_numbers = #tpu.dot_dimension_numbers<[1], [0], [0], [1], [0, 0, 1, 1], [], []>} : vector<8x32xf32>, vector<32x32xf32>, vector<8x32xf32> -> vector<8x32xf32>
    %9 = vector.shape_cast %8 : vector<8x32xf32> to vector<1x8x32xf32>
    %10 = vector.shape_cast %5 : vector<1x32xf32> to vector<1x1x32xf32>
    %11 = vector.broadcast %10 : vector<1x1x32xf32> to vector<1x8x32xf32>
    %12 = arith.addf %9, %11 : vector<1x8x32xf32>
    %c0_10 = arith.constant 0 : index
    %c0_11 = arith.constant 0 : index
    %c0_12 = arith.constant 0 : index
    %13 = vector.load %arg5[%c0_10, %c0_11, %c0_12] : memref<1x8x32xf32, #tpu.memory_space<vmem>>, vector<1x8x32xf32>
    tpu.vector_store %arg5[%c0_10, %c0_11, %c0_12], %12 {strides = array<i32>} : memref<1x8x32xf32, #tpu.memory_space<vmem>>, vector<1x8x32xf32>,
    return
  }
  func.func @transform_0(%arg0: i32) -> (i32, i32, i32) {
    %c0_i32 = arith.constant 0 : i32
    %c0_i32_0 = arith.constant 0 : i32
    %c0_i32_1 = arith.constant 0 : i32
    return %arg0, %c0_i32, %c0_i32_0 : i32, i32, i32
  }
  func.func @transform_1(%arg0: i32) -> (i32, i32) {
    %c0_i32 = arith.constant 0 : i32
    %c0_i32_0 = arith.constant 0 : i32
    %c0_i32_1 = arith.constant 0 : i32
    return %c0_i32, %c0_i32_0 : i32, i32
  }
  func.func @transform_2(%arg0: i32) -> (i32, i32) {
    %c0_i32 = arith.constant 0 : i32
    %c0_i32_0 = arith.constant 0 : i32
    %c0_i32_1 = arith.constant 0 : i32
    return %c0_i32, %c0_i32_0 : i32, i32
  }
  func.func @transform_3(%arg0: i32) -> (i32, i32) {
    %c0_i32 = arith.constant 0 : i32
    %c0_i32_0 = arith.constant 0 : i32
    %c0_i32_1 = arith.constant 0 : i32
    return %c0_i32, %c0_i32_0 : i32, i32
  }
  func.func @transform_4(%arg0: i32) -> (i32, i32, i32) {
    %c0_i32 = arith.constant 0 : i32
    %c0_i32_0 = arith.constant 0 : i32
    %c0_i32_1 = arith.constant 0 : i32
    return %arg0, %c0_i32, %c0_i32_0 : i32, i32, i32
  }
}

</mosaic_0001>

<llo_original>
// kernel: tpu_custom_call.1
$region0: #{tpu_custom_call.1}
  #allocation0 [shape = 'u32[]', space=smem, size = 0x4, offset = 0x4, fixed_abs, tag = 'smem constant byte address 0x4 - core index']
  #allocation1 [shape = 'u32[144,128]{1,0:T(1,128)}', space=vmem, size = 0x12000, scoped, tag = 'internal scratch']
  %s0 = inlined_call_operand.hbm [shape: f32[2,8,32], index: 0, kind: input, shape index: {}]
  %s1 = inlined_call_operand.hbm [shape: f32[32,32], index: 1, kind: input, shape index: {}]
  %s2 = inlined_call_operand.vmem [shape: f32[1,32], index: 2, kind: input, shape index: {}]
  %s3 = inlined_call_operand.hbm [shape: f32[32,32], index: 3, kind: input, shape index: {}]
  %s4 = inlined_call_operand.hbm [shape: f32[2,8,32], index: 4, kind: output, shape index: {}]
  %s5 = sld [smem:[#allocation0]]
  $region61: #{tpu_custom_call.1} parent=0
    _
  %s7 = ssub.s32 1, %s5
  %s8 = scalar_select 0, %s7, %s5
  $region1: #{tpu_custom_call.1} parent=0
    #allocation2 [shape = 'u8[8192]{0}', space=vmem, size = 0x2000, scoped, tag = 'input window, operand 0']
    #allocation3 [shape = 's32[2]{0}', space=sflag, size = 0x8, scoped, tag = 'scoped memory for tpu_custom_call.1']
    #allocation4 [shape = 's32[2]{0}', space=sflag, size = 0x8, scoped, tag = 'scoped memory for tpu_custom_call.1']
    #allocation5 [shape = 'u8[16384]{0}', space=vmem, size = 0x4000, scoped, tag = 'input window, operand 1, single buffered']
    #allocation6 [shape = 's32[1]{0}', space=sflag, size = 0x4, scoped, tag = 'scoped memory for tpu_custom_call.1']
    #allocation7 [shape = 'u8[16384]{0}', space=vmem, size = 0x4000, scoped, tag = 'input window, operand 3, single buffered']
    #allocation8 [shape = 'u8[8192]{0}', space=vmem, size = 0x2000, scoped, tag = 'output window, operand 0']
    %9 = vsyncpa [#allocation3], 0
    %s10 = scalar_lea.sflag [#allocation3], 1
    %11 = vsyncpa %s10, 0
    %12 = vsyncpa [#allocation6], 0
    %13 = vsyncpa [#allocation4], 0
    %s14 = scalar_lea.sflag [#allocation4], 1
    %15 = vsyncpa %s14, 0
    loop: start=0, step=1, limit=4
    $region2: #{tpu_custom_call.1} parent=1 // loop_pre_header
      _
    $region3: #{tpu_custom_call.1} parent=1 // loop_header
      %s17 = sphi 0, %s21
      %p18 = scmp.ge.s32.totalorder %s17, 4
      %s27 = sphi 0, %s29
      %s30 = sphi 0, %s27
      %s31 = sphi 0, %s30
      %s47 = sphi 0, %s31
      %s51 = sphi 0, %s51
      %s53 = sphi 0, %s51
      %s54 = sphi 0, %s53
      %s68 = sphi 0, %s54
      %s72 = sphi 0, %s72
      %s74 = sphi 0, %s72
      %s75 = sphi 0, %s74
      %s89 = sphi 0, %s75
      %s93 = sphi 0, %s93
      %s95 = sphi 0, %s93
      %s96 = sphi 0, %s95
      %s110 = sphi 0, %s96
      %s116 = sphi 0, %s118
      %s119 = sphi 0, %s116
      %s120 = sphi 0, %s119
      %s136 = sphi 0, %s120
    $region4: #{tpu_custom_call.1} parent=1 // loop_header_branch
      %20 = sbr.rel (%p18) target = $region8
    $region5: #{tpu_custom_call.1} parent=1 // loop_body
      %s22 = ssub.s32 %s17, 1
      %s23 = ssub.s32 %s17, 2
      %s24 = sadd.s32 %s17, 1
      %s25 = ssub.s32 %s17, %s24
      %p26 = scmp.eq.s32.totalorder %s25, 0
      %s28 = sadd.s32 %s27, 1
      %s29 = scalar_select %p26, %s27, %s28
      %p32 = pneg %p26
      %p33 = scmp.eq.s32.totalorder %s17, 1
      %p34 = por %p32, %p33
      %p35 = scmp.ne.s32.totalorder %s27, %s30
      %p36 = scmp.eq.s32.totalorder %s17, 0
      %p37 = por %p35, %p36
      %p38 = scmp.ne.s32.totalorder %s27, %s30
      %p39 = scmp.eq.s32.totalorder %s22, 1
      %p40 = por %p38, %p39
      %p41 = scmp.ne.s32.totalorder %s30, %s31
      %p42 = scmp.eq.s32.totalorder %s22, 0
      %p43 = por %p41, %p42
      %p44 = scmp.ne.s32.totalorder %s30, %s31
      %p45 = scmp.eq.s32.totalorder %s23, 1
      %p46 = por %p44, %p45
      %p48 = scmp.ne.s32.totalorder %s31, %s47
      %p49 = scmp.eq.s32.totalorder %s23, 0
      %p50 = por %p48, %p49
      %s52 = sadd.s32 %s51, 1
      %p55 = scmp.eq.s32.totalorder %s17, 1
      %p56 = scmp.ne.s32.totalorder %s51, %s53
      %p57 = scmp.eq.s32.totalorder %s17, 0
      %p58 = por %p56, %p57
      %p59 = scmp.ne.s32.totalorder %s51, %s53
      %p60 = scmp.eq.s32.totalorder %s22, 1
      %p61 = por %p59, %p60
      %p62 = scmp.ne.s32.totalorder %s53, %s54
      %p63 = scmp.eq.s32.totalorder %s22, 0
      %p64 = por %p62, %p63
      %p65 = scmp.ne.s32.totalorder %s53, %s54
      %p66 = scmp.eq.s32.totalorder %s23, 1
      %p67 = por %p65, %p66
      %p69 = scmp.ne.s32.totalorder %s54, %s68
      %p70 = scmp.eq.s32.totalorder %s23, 0
      %p71 = por %p69, %p70
      %s73 = sadd.s32 %s72, 1
      %p76 = scmp.eq.s32.totalorder %s17, 1
      %p77 = scmp.ne.s32.totalorder %s72, %s74
      %p78 = scmp.eq.s32.totalorder %s17, 0
      %p79 = por %p77, %p78
      %p80 = scmp.ne.s32.totalorder %s72, %s74
      %p81 = scmp.eq.s32.totalorder %s22, 1
      %p82 = por %p80, %p81
      %p83 = scmp.ne.s32.totalorder %s74, %s75
      %p84 = scmp.eq.s32.totalorder %s22, 0
      %p85 = por %p83, %p84
      %p86 = scmp.ne.s32.totalorder %s74, %s75
      %p87 = scmp.eq.s32.totalorder %s23, 1
      %p88 = por %p86, %p87
      %p90 = scmp.ne.s32.totalorder %s75, %s89
      %p91 = scmp.eq.s32.totalorder %s23, 0
      %p92 = por %p90, %p91
      %s94 = sadd.s32 %s93, 1
      %p97 = scmp.eq.s32.totalorder %s17, 1
      %p98 = scmp.ne.s32.totalorder %s93, %s95
      %p99 = scmp.eq.s32.totalorder %s17, 0
      %p100 = por %p98, %p99
      %p101 = scmp.ne.s32.totalorder %s93, %s95
      %p102 = scmp.eq.s32.totalorder %s22, 1
      %p103 = por %p101, %p102
      %p104 = scmp.ne.s32.totalorder %s95, %s96
      %p105 = scmp.eq.s32.totalorder %s22, 0
      %p106 = por %p104, %p105
      %p107 = scmp.ne.s32.totalorder %s95, %s96
      %p108 = scmp.eq.s32.totalorder %s23, 1
      %p109 = por %p107, %p108
      %p111 = scmp.ne.s32.totalorder %s96, %s110
      %p112 = scmp.eq.s32.totalorder %s23, 0
      %p113 = por %p111, %p112
      %s114 = ssub.s32 %s17, %s24
      %p115 = scmp.eq.s32.totalorder %s114, 0
      %s117 = sadd.s32 %s116, 1
      %s118 = scalar_select %p115, %s116, %s117
      %p121 = pneg %p115
      %p122 = scmp.eq.s32.totalorder %s17, 1
      %p123 = por %p121, %p122
      %p124 = scmp.ne.s32.totalorder %s116, %s119
      %p125 = scmp.eq.s32.totalorder %s17, 0
      %p126 = por %p124, %p125
      %p127 = scmp.ne.s32.totalorder %s116, %s119
      %p128 = scmp.eq.s32.totalorder %s22, 1
      %p129 = por %p127, %p128
      %p130 = scmp.ne.s32.totalorder %s119, %s120
      %p131 = scmp.eq.s32.totalorder %s22, 0
      %p132 = por %p130, %p131
      %p133 = scmp.ne.s32.totalorder %s119, %s120
      %p134 = scmp.eq.s32.totalorder %s23, 1
      %p135 = por %p133, %p134
      %p137 = scmp.ne.s32.totalorder %s120, %s136
      %p138 = scmp.eq.s32.totalorder %s23, 0
      %p139 = por %p137, %p138
      %p140 = scmp.le.s32.totalorder 1, %s17
      %p141 = scmp.lt.s32.totalorder %s17, 3
      %p142 = pnand %p140, %p141
      %p143 = pneg %p142
      // Predicated region
      $region9: #{tpu_custom_call.1} parent=5 // pred_check
        _
      $region10: #{tpu_custom_call.1} parent=5 // pred_check_branch
        %145 = sbr.rel (%p142) target = $region12
      $region11: #{tpu_custom_call.1} parent=5 // pred_region
        %s146 = ssub.s32 %s17, 1
        // Predicated region
        $region13: #{tpu_custom_call.1} parent=11 // pred_check
          %p147 = pneg %p64
        $region14: #{tpu_custom_call.1} parent=11 // pred_check_branch
          %149 = sbr.rel (%p147) target = $region16
        $region15: #{tpu_custom_call.1} parent=11 // pred_region
          %s151 = ssub.s32 512, 512
          %152 = vsyncadd [#allocation6], %s151
          %s153 = sshll.u32 [#allocation5], 4
          %s154 = int_to_ptr.vmem [resolvable:$true] %s153
          %159 = dma.hbm_to_vmem [thread:$0]  %s1, 512, %s154, [#allocation6], 128, 128, 8
        $region16: #{tpu_custom_call.1} parent=11 // pred_fallthru
          _
        // Predicated region
        $region17: #{tpu_custom_call.1} parent=11 // pred_check
          %p160 = pneg %p85
        $region18: #{tpu_custom_call.1} parent=11 // pred_check_branch
          %162 = sbr.rel (%p160) target = $region20
        $region19: #{tpu_custom_call.1} parent=11 // pred_region
          _
        $region20: #{tpu_custom_call.1} parent=11 // pred_fallthru
          _
        // Predicated region
        $region21: #{tpu_custom_call.1} parent=11 // pred_check
          %p163 = pneg %p106
        $region22: #{tpu_custom_call.1} parent=11 // pred_check_branch
          %165 = sbr.rel (%p163) target = $region24
        $region23: #{tpu_custom_call.1} parent=11 // pred_region
          %s167 = ssub.s32 512, 512
          %168 = vsyncadd [#allocation6], %s167
          %s169 = sshll.u32 [#allocation7], 4
          %s170 = int_to_ptr.vmem [resolvable:$true] %s169
          %175 = dma.hbm_to_vmem [thread:$0]  %s3, 512, %s170, [#allocation6], 128, 128, 8
        $region24: #{tpu_custom_call.1} parent=11 // pred_fallthru
          _
      $region12: #{tpu_custom_call.1} parent=5 // pred_fallthru
        _
      %p176 = scmp.lt.s32.totalorder %s17, 2
      // Predicated region
      $region25: #{tpu_custom_call.1} parent=5 // pred_check
        %p177 = pneg %p176
      $region26: #{tpu_custom_call.1} parent=5 // pred_check_branch
        %179 = sbr.rel (%p177) target = $region28
      $region27: #{tpu_custom_call.1} parent=5 // pred_region
        // Predicated region
        $region29: #{tpu_custom_call.1} parent=27 // pred_check
          %p180 = pneg %p37
        $region30: #{tpu_custom_call.1} parent=27 // pred_check_branch
          %182 = sbr.rel (%p180) target = $region32
        $region31: #{tpu_custom_call.1} parent=27 // pred_region
          %s183 = sand.u32 %s27, 1
          %s184 = scalar_lea.sflag [#allocation3], %s183
          %s185 = sand.u32 %s27, 1
          %s186 = smul.addr %s185, 8
          %s187 = scalar_lea.vmem [#allocation2], %s186
          %s189 = ssub.s32 128, 128
          %190 = vsyncadd %s184, %s189
          %s191 = smul.addr %s17, 128
          %s192 = scalar_lea.hbm %s0, %s191
          %s194 = sshll.u32 %s187, 4
          %s195 = int_to_ptr.vmem [resolvable:$true] %s194
          %197 = dma.hbm_to_vmem [thread:$0]  %s192, 128, %s195, %s184
        $region32: #{tpu_custom_call.1} parent=27 // pred_fallthru
          _
      $region28: #{tpu_custom_call.1} parent=5 // pred_fallthru
        _
      %p198 = scmp.le.s32.totalorder 1, %s17
      %p199 = scmp.lt.s32.totalorder %s17, 3
      %p200 = pnand %p198, %p199
      %p201 = pneg %p200
      // Predicated region
      $region33: #{tpu_custom_call.1} parent=5 // pred_check
        _
      $region34: #{tpu_custom_call.1} parent=5 // pred_check_branch
        %203 = sbr.rel (%p200) target = $region36
      $region35: #{tpu_custom_call.1} parent=5 // pred_region
        %s204 = ssub.s32 %s17, 1
        %s205 = sand.u32 %s30, 1
        %s206 = scalar_lea.sflag [#allocation3], %s205
        %s207 = sand.u32 %s30, 1
        %s208 = smul.addr %s207, 8
        %s209 = scalar_lea.vmem [#allocation2], %s208
        // Predicated region
        $region37: #{tpu_custom_call.1} parent=35 // pred_check
          %p210 = pneg %p43
        $region38: #{tpu_custom_call.1} parent=35 // pred_check_branch
          %212 = sbr.rel (%p210) target = $region40
        $region39: #{tpu_custom_call.1} parent=35 // pred_region
          %213 = dma.done %s206, 128
        $region40: #{tpu_custom_call.1} parent=35 // pred_fallthru
          _
        // Predicated region
        $region41: #{tpu_custom_call.1} parent=35 // pred_check
          %p214 = pneg %p64
        $region42: #{tpu_custom_call.1} parent=35 // pred_check_branch
          %216 = sbr.rel (%p214) target = $region44
        $region43: #{tpu_custom_call.1} parent=35 // pred_region
          %217 = dma.done [#allocation6], 512
        $region44: #{tpu_custom_call.1} parent=35 // pred_fallthru
          _
        // Predicated region
        $region45: #{tpu_custom_call.1} parent=35 // pred_check
          %p218 = pneg %p106
        $region46: #{tpu_custom_call.1} parent=35 // pred_check_branch
          %220 = sbr.rel (%p218) target = $region48
        $region47: #{tpu_custom_call.1} parent=35 // pred_region
          %221 = dma.done [#allocation6], 512
        $region48: #{tpu_custom_call.1} parent=35 // pred_fallthru
          _
        %s222 = sand.u32 %s30, 1
        %s223 = scalar_lea.sflag [#allocation3], %s222
        %s224 = sand.u32 %s30, 1
        %s225 = smul.addr %s224, 8
        %s226 = scalar_lea.vmem [#allocation2], %s225
        %p227 = pneg %p43
        %p228 = pneg %p40
        %p229 = pneg %p64
        %p230 = pneg %p61
        %p231 = pneg %p85
        %p232 = pneg %p82
        %p233 = pneg %p106
        %p234 = pneg %p103
        %p235 = pneg %p132
        %p236 = pneg %p129
        %s237 = sand.u32 %s119, 1
        %s238 = scalar_lea.sflag [#allocation4], %s237
        %s239 = sand.u32 %s119, 1
        %s240 = smul.addr %s239, 8
        %s241 = scalar_lea.vmem [#allocation8], %s240
        %v242 = vld [vmem:[%s209] sm:$0xff]
        %vm243 = vcmask 261120
        %v244 = vsel %vm243, %v242, 0.0
        %v245 = vrot.slane %v244, 4
        %v246 = vadd.f32 %v244, %v245
        %v247 = vrot.slane %v246, 2
        %v248 = vadd.f32 %v246, %v247
        %v249 = vrot.slane %v248, 1
        %v250 = vadd.f32 %v248, %v249
        %v251 = vld [vmem:[#allocation7] sm:$0xff]
        %v252 = vld [vmem:[#allocation7 + $0x8] sm:$0xff]
        %v253 = vld [vmem:[#allocation7 + $0x10] sm:$0xff]
        %v254 = vld [vmem:[#allocation7 + $0x18] sm:$0xff]
        %v256 = vsel %vm243, %v250, 0
        %258 = vmatprep.subr.mxu0 0.0
        %259 = vmatpush1.msra.mxu0 0.0
        %260 = vmatprep.subr.mxu0 0.0
        %261 = vmatpush1.msra.mxu0 0.0
        %262 = vmatprep.subr.mxu0 0.0
        %263 = vmatpush1.msra.mxu0 0.0
        %264 = vmatprep.subr.mxu0 0.0
        %265 = vmatpush1.msra.mxu0 0.0
        %266 = vmatprep.subr.mxu0 0.0
        %267 = vmatpush1.msra.mxu0 0.0
        %268 = vmatprep.subr.mxu0 0.0
        %269 = vmatpush1.msra.mxu0 0.0
        %270 = vmatprep.subr.mxu0 0.0
        %271 = vmatpush1.msra.mxu0 0.0
        %272 = vmatprep.subr.mxu0 0.0
        %273 = vmatpush1.msra.mxu0 0.0
        %274 = vmatprep.subr.mxu0 0.0
        %275 = vmatpush1.msra.mxu0 0.0
        %276 = vmatprep.subr.mxu0 0.0
        %277 = vmatpush1.msra.mxu0 0.0
        %278 = vmatprep.subr.mxu0 0.0
        %279 = vmatpush1.msra.mxu0 0.0
        %280 = vmatprep.subr.mxu0 0.0
        %281 = vmatpush1.msra.mxu0 0.0
        %282 = vmatprep.subr.mxu0 0.0
        %283 = vmatpush1.msra.mxu0 %v254
        %284 = vmatprep.subr.mxu0 0.0
        %285 = vmatpush1.msra.mxu0 %v253
        %286 = vmatprep.subr.mxu0 0.0
        %287 = vmatpush1.msra.mxu0 %v252
        %288 = vmatprep.subr.mxu0 0.0
        %289 = vmatpush1.msra.mxu0 %v251
        %290 = vmatprep.subr.mxu0 0.0
        %291 = vmatpush2.msra.mxu0 0.0
        %292 = vmatprep.subr.mxu0 0.0
        %293 = vmatpush2.msra.mxu0 0.0
        %294 = vmatprep.subr.mxu0 0.0
        %295 = vmatpush2.msra.mxu0 0.0
        %296 = vmatprep.subr.mxu0 0.0
        %297 = vmatpush2.msra.mxu0 0.0
        %298 = vmatprep.subr.mxu0 0.0
        %299 = vmatpush2.msra.mxu0 0.0
        %300 = vmatprep.subr.mxu0 0.0
        %301 = vmatpush2.msra.mxu0 0.0
        %302 = vmatprep.subr.mxu0 0.0
        %303 = vmatpush2.msra.mxu0 0.0
        %304 = vmatprep.subr.mxu0 0.0
        %305 = vmatpush2.msra.mxu0 0.0
        %306 = vmatprep.subr.mxu0 0.0
        %307 = vmatpush2.msra.mxu0 0.0
        %308 = vmatprep.subr.mxu0 0.0
        %309 = vmatpush2.msra.mxu0 0.0
        %310 = vmatprep.subr.mxu0 0.0
        %311 = vmatpush2.msra.mxu0 0.0
        %312 = vmatprep.subr.mxu0 0.0
        %313 = vmatpush2.msra.mxu0 0.0
        %314 = vmatprep.subr.mxu0 0.0
        %315 = vmatpush2.msra.mxu0 0.0
        %316 = vmatprep.subr.mxu0 0.0
        %317 = vmatpush2.msra.mxu0 0.0
        %318 = vmatprep.subr.mxu0 0.0
        %319 = vmatpush2.msra.mxu0 0.0
        %320 = vmatprep.subr.mxu0 0.0
        %321 = vmatpush2.msra.mxu0 0.0
        %322 = vmatprep.mubr.f32.mxu0 0.0
        %323 = vmatmul.mubr.f32.gmra.mxu0 %v256
        %v324 = vpop.f32.mrf.mxu0
        %v325 = vadd.f32 0.0, %v324
        %v326 = vpop.f32.mrf.mxu0
        %327 = vdwg.mxu0
        %v328 = vld [vmem:[%s2] sm:$0x1]
        %v329 = vsub.f32 %v328, %v325
        %v330 = vld [vmem:[#allocation5] sm:$0xff]
        %v331 = vld [vmem:[#allocation5 + $0x8] sm:$0xff]
        %v332 = vld [vmem:[#allocation5 + $0x10] sm:$0xff]
        %v333 = vld [vmem:[#allocation5 + $0x18] sm:$0xff]
        %v335 = vsel %vm243, %v242, 0
        %337 = vmatprep.subr.mxu0 0.0
        %338 = vmatpush1.msra.mxu0 0.0
        %339 = vmatprep.subr.mxu0 0.0
        %340 = vmatpush1.msra.mxu0 0.0
        %341 = vmatprep.subr.mxu0 0.0
        %342 = vmatpush1.msra.mxu0 0.0
        %343 = vmatprep.subr.mxu0 0.0
        %344 = vmatpush1.msra.mxu0 0.0
        %345 = vmatprep.subr.mxu0 0.0
        %346 = vmatpush1.msra.mxu0 0.0
        %347 = vmatprep.subr.mxu0 0.0
        %348 = vmatpush1.msra.mxu0 0.0
        %349 = vmatprep.subr.mxu0 0.0
        %350 = vmatpush1.msra.mxu0 0.0
        %351 = vmatprep.subr.mxu0 0.0
        %352 = vmatpush1.msra.mxu0 0.0
        %353 = vmatprep.subr.mxu0 0.0
        %354 = vmatpush1.msra.mxu0 0.0
        %355 = vmatprep.subr.mxu0 0.0
        %356 = vmatpush1.msra.mxu0 0.0
        %357 = vmatprep.subr.mxu0 0.0
        %358 = vmatpush1.msra.mxu0 0.0
        %359 = vmatprep.subr.mxu0 0.0
        %360 = vmatpush1.msra.mxu0 0.0
        %361 = vmatprep.subr.mxu0 0.0
        %362 = vmatpush1.msra.mxu0 %v333
        %363 = vmatprep.subr.mxu0 0.0
        %364 = vmatpush1.msra.mxu0 %v332
        %365 = vmatprep.subr.mxu0 0.0
        %366 = vmatpush1.msra.mxu0 %v331
        %367 = vmatprep.subr.mxu0 0.0
        %368 = vmatpush1.msra.mxu0 %v330
        %369 = vmatprep.subr.mxu0 0.0
        %370 = vmatpush2.msra.mxu0 0.0
        %371 = vmatprep.subr.mxu0 0.0
        %372 = vmatpush2.msra.mxu0 0.0
        %373 = vmatprep.subr.mxu0 0.0
        %374 = vmatpush2.msra.mxu0 0.0
        %375 = vmatprep.subr.mxu0 0.0
        %376 = vmatpush2.msra.mxu0 0.0
        %377 = vmatprep.subr.mxu0 0.0
        %378 = vmatpush2.msra.mxu0 0.0
        %379 = vmatprep.subr.mxu0 0.0
        %380 = vmatpush2.msra.mxu0 0.0
        %381 = vmatprep.subr.mxu0 0.0
        %382 = vmatpush2.msra.mxu0 0.0
        %383 = vmatprep.subr.mxu0 0.0
        %384 = vmatpush2.msra.mxu0 0.0
        %385 = vmatprep.subr.mxu0 0.0
        %386 = vmatpush2.msra.mxu0 0.0
        %387 = vmatprep.subr.mxu0 0.0
        %388 = vmatpush2.msra.mxu0 0.0
        %389 = vmatprep.subr.mxu0 0.0
        %390 = vmatpush2.msra.mxu0 0.0
        %391 = vmatprep.subr.mxu0 0.0
        %392 = vmatpush2.msra.mxu0 0.0
        %393 = vmatprep.subr.mxu0 0.0
        %394 = vmatpush2.msra.mxu0 0.0
        %395 = vmatprep.subr.mxu0 0.0
        %396 = vmatpush2.msra.mxu0 0.0
        %397 = vmatprep.subr.mxu0 0.0
        %398 = vmatpush2.msra.mxu0 0.0
        %399 = vmatprep.subr.mxu0 0.0
        %400 = vmatpush2.msra.mxu0 0.0
        %401 = vmatprep.mubr.f32.mxu0 0.0
        %402 = vmatmul.mubr.f32.gmra.mxu0 %v335
        %v403 = vpop.f32.mrf.mxu0
        %v404 = vadd.f32 0.0, %v403
        %v405 = vpop.f32.mrf.mxu0
        %406 = vdwg.mxu0
        %v408 = vlaneseq
        %v409 = vshrl.u32 %v408, 7
        %v410 = vsub.s32 0, %v409
        %v411 = vrot.slane %v329, %v410
        %v413 = vadd.f32 %v404, %v411
        %414 = vst.msk [vmem:[%s241] sm:$0xff] %vm243, %v413
        %s415 = sand.u32 %s119, 1
        %s416 = scalar_lea.sflag [#allocation4], %s415
        %s417 = sand.u32 %s119, 1
        %s418 = smul.addr %s417, 8
        %s419 = scalar_lea.vmem [#allocation8], %s418
        // Predicated region
        $region49: #{tpu_custom_call.1} parent=35 // pred_check
          %p420 = pneg %p129
        $region50: #{tpu_custom_call.1} parent=35 // pred_check_branch
          %422 = sbr.rel (%p420) target = $region52
        $region51: #{tpu_custom_call.1} parent=35 // pred_region
          %s424 = ssub.s32 128, 128
          %425 = vsyncadd %s416, %s424
          %s426 = smul.addr %s22, 128
          %s427 = scalar_lea.hbm %s4, %s426
          %s429 = sshll.u32 %s419, 4
          %s430 = int_to_ptr.vmem [resolvable:$true] %s429
          %432 = dma.vmem_to_hbm [thread:$0]  %s430, 128, %s427, %s416
        $region52: #{tpu_custom_call.1} parent=35 // pred_fallthru
          _
      $region36: #{tpu_custom_call.1} parent=5 // pred_fallthru
        _
      %p433 = scmp.le.s32.totalorder 2, %s17
      // Predicated region
      $region53: #{tpu_custom_call.1} parent=5 // pred_check
        %p434 = pneg %p433
      $region54: #{tpu_custom_call.1} parent=5 // pred_check_branch
        %436 = sbr.rel (%p434) target = $region56
      $region55: #{tpu_custom_call.1} parent=5 // pred_region
        %s437 = ssub.s32 %s17, 2
        // Predicated region
        $region57: #{tpu_custom_call.1} parent=55 // pred_check
          %p438 = pneg %p135
        $region58: #{tpu_custom_call.1} parent=55 // pred_check_branch
          %440 = sbr.rel (%p438) target = $region60
        $region59: #{tpu_custom_call.1} parent=55 // pred_region
          %s441 = sand.u32 %s120, 1
          %s442 = scalar_lea.sflag [#allocation4], %s441
          %s443 = sand.u32 %s120, 1
          %s444 = smul.addr %s443, 8
          %s445 = scalar_lea.vmem [#allocation8], %s444
          %446 = dma.done %s442, 128
        $region60: #{tpu_custom_call.1} parent=55 // pred_fallthru
          _
      $region56: #{tpu_custom_call.1} parent=5 // pred_fallthru
        _
    $region6: #{tpu_custom_call.1} parent=1 // loop_footer
      %s21 = sadd.s32 1, %s17
    $region7: #{tpu_custom_call.1} parent=1 // loop_footer_branch
      %16 = sbr.rel target = $region3
    $region8: #{tpu_custom_call.1} parent=1 // loop_exit
      _
    %447 = vsyncpa [#allocation3], 1
    %s448 = scalar_lea.sflag [#allocation3], 1
    %449 = vsyncpa %s448, 1
    %450 = vsyncpa [#allocation6], 1
    %451 = vsyncpa [#allocation4], 1
    %s452 = scalar_lea.sflag [#allocation4], 1
    %453 = vsyncpa %s452, 1

// kernel: tpu_custom_call.1
$region0: #{tpu_custom_call.1}
  #allocation0 [shape = 'u32[]', space=smem, size = 0x4, offset = 0x4, fixed_abs, tag = 'smem constant byte address 0x4 - core index']
  #allocation1 [shape = 'u32[144,128]{1,0:T(1,128)}', space=vmem, size = 0x12000, scoped, tag = 'internal scratch']
  %s0 = inlined_call_operand.hbm [shape: f32[2,8,32], index: 0, kind: input, shape index: {}]
  %s1 = inlined_call_operand.hbm [shape: f32[32,32], index: 1, kind: input, shape index: {}]
  %s2 = inlined_call_operand.vmem [shape: f32[1,32], index: 2, kind: input, shape index: {}]
  %s3 = inlined_call_operand.hbm [shape: f32[32,32], index: 3, kind: input, shape index: {}]
  %s4 = inlined_call_operand.hbm [shape: f32[2,8,32], index: 4, kind: output, shape index: {}]
  %s5 = sld [smem:[#allocation0]]
  $region61: #{tpu_custom_call.1} parent=0
    _
  %s7 = ssub.s32 1, %s5
  %s8 = scalar_select 0, %s7, %s5
  $region1: #{tpu_custom_call.1} parent=0
    #allocation2 [shape = 'u8[8192]{0}', space=vmem, size = 0x2000, scoped, tag = 'input window, operand 0']
    #allocation3 [shape = 's32[2]{0}', space=sflag, size = 0x8, scoped, tag = 'scoped memory for tpu_custom_call.1']
    #allocation4 [shape = 's32[2]{0}', space=sflag, size = 0x8, scoped, tag = 'scoped memory for tpu_custom_call.1']
    #allocation5 [shape = 'u8[16384]{0}', space=vmem, size = 0x4000, scoped, tag = 'input window, operand 1, single buffered']
    #allocation6 [shape = 's32[1]{0}', space=sflag, size = 0x4, scoped, tag = 'scoped memory for tpu_custom_call.1']
    #allocation7 [shape = 'u8[16384]{0}', space=vmem, size = 0x4000, scoped, tag = 'input window, operand 3, single buffered']
    #allocation8 [shape = 'u8[8192]{0}', space=vmem, size = 0x2000, scoped, tag = 'output window, operand 0']
    %9 = vsyncpa [#allocation3], 0
    %s10 = scalar_lea.sflag [#allocation3], 1
    %11 = vsyncpa %s10, 0
    %12 = vsyncpa [#allocation6], 0
    %13 = vsyncpa [#allocation4], 0
    %s14 = scalar_lea.sflag [#allocation4], 1
    %15 = vsyncpa %s14, 0
    loop: start=0, step=1, limit=4
    $region2: #{tpu_custom_call.1} parent=1 // loop_pre_header
      _
    $region3: #{tpu_custom_call.1} parent=1 // loop_header
      %s17 = sphi 0, %s21
      %p18 = scmp.ge.s32.totalorder %s17, 4
      %s27 = sphi 0, %s29
      %s30 = sphi 0, %s27
      %s31 = sphi 0, %s30
      %s47 = sphi 0, %s31
      %s51 = sphi 0, %s51
      %s53 = sphi 0, %s51
      %s54 = sphi 0, %s53
      %s68 = sphi 0, %s54
      %s72 = sphi 0, %s72
      %s74 = sphi 0, %s72
      %s75 = sphi 0, %s74
      %s89 = sphi 0, %s75
      %s93 = sphi 0, %s93
      %s95 = sphi 0, %s93
      %s96 = sphi 0, %s95
      %s110 = sphi 0, %s96
      %s116 = sphi 0, %s118
      %s119 = sphi 0, %s116
      %s120 = sphi 0, %s119
      %s136 = sphi 0, %s120
    $region4: #{tpu_custom_call.1} parent=1 // loop_header_branch
      %20 = sbr.rel (%p18) target = $region8
    $region5: #{tpu_custom_call.1} parent=1 // loop_body
      %s22 = ssub.s32 %s17, 1
      %s23 = ssub.s32 %s17, 2
      %s24 = sadd.s32 %s17, 1
      %s25 = ssub.s32 %s17, %s24
      %p26 = scmp.eq.s32.totalorder %s25, 0
      %s28 = sadd.s32 %s27, 1
      %s29 = scalar_select %p26, %s27, %s28
      %p32 = pneg %p26
      %p33 = scmp.eq.s32.totalorder %s17, 1
      %p34 = por %p32, %p33
      %p35 = scmp.ne.s32.totalorder %s27, %s30
      %p36 = scmp.eq.s32.totalorder %s17, 0
      %p37 = por %p35, %p36
      %p38 = scmp.ne.s32.totalorder %s27, %s30
      %p39 = scmp.eq.s32.totalorder %s22, 1
      %p40 = por %p38, %p39
      %p41 = scmp.ne.s32.totalorder %s30, %s31
      %p42 = scmp.eq.s32.totalorder %s22, 0
      %p43 = por %p41, %p42
      %p44 = scmp.ne.s32.totalorder %s30, %s31
      %p45 = scmp.eq.s32.totalorder %s23, 1
      %p46 = por %p44, %p45
      %p48 = scmp.ne.s32.totalorder %s31, %s47
      %p49 = scmp.eq.s32.totalorder %s23, 0
      %p50 = por %p48, %p49
      %s52 = sadd.s32 %s51, 1
      %p55 = scmp.eq.s32.totalorder %s17, 1
      %p56 = scmp.ne.s32.totalorder %s51, %s53
      %p57 = scmp.eq.s32.totalorder %s17, 0
      %p58 = por %p56, %p57
      %p59 = scmp.ne.s32.totalorder %s51, %s53
      %p60 = scmp.eq.s32.totalorder %s22, 1
      %p61 = por %p59, %p60
      %p62 = scmp.ne.s32.totalorder %s53, %s54
      %p63 = scmp.eq.s32.totalorder %s22, 0
      %p64 = por %p62, %p63
      %p65 = scmp.ne.s32.totalorder %s53, %s54
      %p66 = scmp.eq.s32.totalorder %s23, 1
      %p67 = por %p65, %p66
      %p69 = scmp.ne.s32.totalorder %s54, %s68
      %p70 = scmp.eq.s32.totalorder %s23, 0
      %p71 = por %p69, %p70
      %s73 = sadd.s32 %s72, 1
      %p76 = scmp.eq.s32.totalorder %s17, 1
      %p77 = scmp.ne.s32.totalorder %s72, %s74
      %p78 = scmp.eq.s32.totalorder %s17, 0
      %p79 = por %p77, %p78
      %p80 = scmp.ne.s32.totalorder %s72, %s74
      %p81 = scmp.eq.s32.totalorder %s22, 1
      %p82 = por %p80, %p81
      %p83 = scmp.ne.s32.totalorder %s74, %s75
      %p84 = scmp.eq.s32.totalorder %s22, 0
      %p85 = por %p83, %p84
      %p86 = scmp.ne.s32.totalorder %s74, %s75
      %p87 = scmp.eq.s32.totalorder %s23, 1
      %p88 = por %p86, %p87
      %p90 = scmp.ne.s32.totalorder %s75, %s89
      %p91 = scmp.eq.s32.totalorder %s23, 0
      %p92 = por %p90, %p91
      %s94 = sadd.s32 %s93, 1
      %p97 = scmp.eq.s32.totalorder %s17, 1
      %p98 = scmp.ne.s32.totalorder %s93, %s95
      %p99 = scmp.eq.s32.totalorder %s17, 0
      %p100 = por %p98, %p99
      %p101 = scmp.ne.s32.totalorder %s93, %s95
      %p102 = scmp.eq.s32.totalorder %s22, 1
      %p103 = por %p101, %p102
      %p104 = scmp.ne.s32.totalorder %s95, %s96
      %p105 = scmp.eq.s32.totalorder %s22, 0
      %p106 = por %p104, %p105
      %p107 = scmp.ne.s32.totalorder %s95, %s96
      %p108 = scmp.eq.s32.totalorder %s23, 1
      %p109 = por %p107, %p108
      %p111 = scmp.ne.s32.totalorder %s96, %s110
      %p112 = scmp.eq.s32.totalorder %s23, 0
      %p113 = por %p111, %p112
      %s114 = ssub.s32 %s17, %s24
      %p115 = scmp.eq.s32.totalorder %s114, 0
      %s117 = sadd.s32 %s116, 1
      %s118 = scalar_select %p115, %s116, %s117
      %p121 = pneg %p115
      %p122 = scmp.eq.s32.totalorder %s17, 1
      %p123 = por %p121, %p122
      %p124 = scmp.ne.s32.totalorder %s116, %s119
      %p125 = scmp.eq.s32.totalorder %s17, 0
      %p126 = por %p124, %p125
      %p127 = scmp.ne.s32.totalorder %s116, %s119
      %p128 = scmp.eq.s32.totalorder %s22, 1
      %p129 = por %p127, %p128
      %p130 = scmp.ne.s32.totalorder %s119, %s120
      %p131 = scmp.eq.s32.totalorder %s22, 0
      %p132 = por %p130, %p131
      %p133 = scmp.ne.s32.totalorder %s119, %s120
      %p134 = scmp.eq.s32.totalorder %s23, 1
      %p135 = por %p133, %p134
      %p137 = scmp.ne.s32.totalorder %s120, %s136
      %p138 = scmp.eq.s32.totalorder %s23, 0
      %p139 = por %p137, %p138
      %p140 = scmp.le.s32.totalorder 1, %s17
      %p141 = scmp.lt.s32.totalorder %s17, 3
      %p142 = pnand %p140, %p141
      %p143 = pneg %p142
      // Predicated region
      $region9: #{tpu_custom_call.1} parent=5 // pred_check
        _
      $region10: #{tpu_custom_call.1} parent=5 // pred_check_branch
        %145 = sbr.rel (%p142) target = $region12
      $region11: #{tpu_custom_call.1} parent=5 // pred_region
        %s146 = ssub.s32 %s17, 1
        // Predicated region
        $region13: #{tpu_custom_call.1} parent=11 // pred_check
          %p147 = pneg %p64
        $region14: #{tpu_custom_call.1} parent=11 // pred_check_branch
          %149 = sbr.rel (%p147) target = $region16
        $region15: #{tpu_custom_call.1} parent=11 // pred_region
          %s151 = ssub.s32 512, 512
          %152 = vsyncadd [#allocation6], %s151
          %s153 = sshll.u32 [#allocation5], 4
          %s154 = int_to_ptr.vmem [resolvable:$true] %s153
          %159 = dma.hbm_to_vmem [thread:$0]  %s1, 512, %s154, [#allocation6], 128, 128, 8
        $region16: #{tpu_custom_call.1} parent=11 // pred_fallthru
          _
        // Predicated region
        $region17: #{tpu_custom_call.1} parent=11 // pred_check
          %p160 = pneg %p85
        $region18: #{tpu_custom_call.1} parent=11 // pred_check_branch
          %162 = sbr.rel (%p160) target = $region20
        $region19: #{tpu_custom_call.1} parent=11 // pred_region
          _
        $region20: #{tpu_custom_call.1} parent=11 // pred_fallthru
          _
        // Predicated region
        $region21: #{tpu_custom_call.1} parent=11 // pred_check
          %p163 = pneg %p106
        $region22: #{tpu_custom_call.1} parent=11 // pred_check_branch
          %165 = sbr.rel (%p163) target = $region24
        $region23: #{tpu_custom_call.1} parent=11 // pred_region
          %s167 = ssub.s32 512, 512
          %168 = vsyncadd [#allocation6], %s167
          %s169 = sshll.u32 [#allocation7], 4
          %s170 = int_to_ptr.vmem [resolvable:$true] %s169
          %175 = dma.hbm_to_vmem [thread:$0]  %s3, 512, %s170, [#allocation6], 128, 128, 8
        $region24: #{tpu_custom_call.1} parent=11 // pred_fallthru
          _
      $region12: #{tpu_custom_call.1} parent=5 // pred_fallthru
        _
      %p176 = scmp.lt.s32.totalorder %s17, 2
      // Predicated region
      $region25: #{tpu_custom_call.1} parent=5 // pred_check
        %p177 = pneg %p176
      $region26: #{tpu_custom_call.1} parent=5 // pred_check_branch
        %179 = sbr.rel (%p177) target = $region28
      $region27: #{tpu_custom_call.1} parent=5 // pred_region
        // Predicated region
        $region29: #{tpu_custom_call.1} parent=27 // pred_check
          %p180 = pneg %p37
        $region30: #{tpu_custom_call.1} parent=27 // pred_check_branch
          %182 = sbr.rel (%p180) target = $region32
        $region31: #{tpu_custom_call.1} parent=27 // pred_region
          %s183 = sand.u32 %s27, 1
          %s184 = scalar_lea.sflag [#allocation3], %s183
          %s185 = sand.u32 %s27, 1
          %s186 = smul.addr %s185, 8
          %s187 = scalar_lea.vmem [#allocation2], %s186
          %s189 = ssub.s32 128, 128
          %190 = vsyncadd %s184, %s189
          %s191 = smul.addr %s17, 128
          %s192 = scalar_lea.hbm %s0, %s191
          %s194 = sshll.u32 %s187, 4
          %s195 = int_to_ptr.vmem [resolvable:$true] %s194
          %197 = dma.hbm_to_vmem [thread:$0]  %s192, 128, %s195, %s184
        $region32: #{tpu_custom_call.1} parent=27 // pred_fallthru
          _
      $region28: #{tpu_custom_call.1} parent=5 // pred_fallthru
        _
      %p198 = scmp.le.s32.totalorder 1, %s17
      %p199 = scmp.lt.s32.totalorder %s17, 3
      %p200 = pnand %p198, %p199
      %p201 = pneg %p200
      // Predicated region
      $region33: #{tpu_custom_call.1} parent=5 // pred_check
        _
      $region34: #{tpu_custom_call.1} parent=5 // pred_check_branch
        %203 = sbr.rel (%p200) target = $region36
      $region35: #{tpu_custom_call.1} parent=5 // pred_region
        %s204 = ssub.s32 %s17, 1
        %s205 = sand.u32 %s30, 1
        %s206 = scalar_lea.sflag [#allocation3], %s205
        %s207 = sand.u32 %s30, 1
        %s208 = smul.addr %s207, 8
        %s209 = scalar_lea.vmem [#allocation2], %s208
        // Predicated region
        $region37: #{tpu_custom_call.1} parent=35 // pred_check
          %p210 = pneg %p43
        $region38: #{tpu_custom_call.1} parent=35 // pred_check_branch
          %212 = sbr.rel (%p210) target = $region40
        $region39: #{tpu_custom_call.1} parent=35 // pred_region
          %213 = dma.done %s206, 128
        $region40: #{tpu_custom_call.1} parent=35 // pred_fallthru
          _
        // Predicated region
        $region41: #{tpu_custom_call.1} parent=35 // pred_check
          %p214 = pneg %p64
        $region42: #{tpu_custom_call.1} parent=35 // pred_check_branch
          %216 = sbr.rel (%p214) target = $region44
        $region43: #{tpu_custom_call.1} parent=35 // pred_region
          %217 = dma.done [#allocation6], 512
        $region44: #{tpu_custom_call.1} parent=35 // pred_fallthru
          _
        // Predicated region
        $region45: #{tpu_custom_call.1} parent=35 // pred_check
          %p218 = pneg %p106
        $region46: #{tpu_custom_call.1} parent=35 // pred_check_branch
          %220 = sbr.rel (%p218) target = $region48
        $region47: #{tpu_custom_call.1} parent=35 // pred_region
          %221 = dma.done [#allocation6], 512
        $region48: #{tpu_custom_call.1} parent=35 // pred_fallthru
          _
        %s222 = sand.u32 %s30, 1
        %s223 = scalar_lea.sflag [#allocation3], %s222
        %s224 = sand.u32 %s30, 1
        %s225 = smul.addr %s224, 8
        %s226 = scalar_lea.vmem [#allocation2], %s225
        %p227 = pneg %p43
        %p228 = pneg %p40
        %p229 = pneg %p64
        %p230 = pneg %p61
        %p231 = pneg %p85
        %p232 = pneg %p82
        %p233 = pneg %p106
        %p234 = pneg %p103
        %p235 = pneg %p132
        %p236 = pneg %p129
        %s237 = sand.u32 %s119, 1
        %s238 = scalar_lea.sflag [#allocation4], %s237
        %s239 = sand.u32 %s119, 1
        %s240 = smul.addr %s239, 8
        %s241 = scalar_lea.vmem [#allocation8], %s240
        %v242 = vld [vmem:[%s209] sm:$0xff]
        %vm243 = vcmask 261120
        %v244 = vsel %vm243, %v242, 0.0
        %v245 = vrot.slane %v244, 4
        %v246 = vadd.f32 %v244, %v245
        %v247 = vrot.slane %v246, 2
        %v248 = vadd.f32 %v246, %v247
        %v249 = vrot.slane %v248, 1
        %v250 = vadd.f32 %v248, %v249
        %v251 = vld [vmem:[#allocation7] sm:$0xff]
        %v252 = vld [vmem:[#allocation7 + $0x8] sm:$0xff]
        %v253 = vld [vmem:[#allocation7 + $0x10] sm:$0xff]
        %v254 = vld [vmem:[#allocation7 + $0x18] sm:$0xff]
        %v256 = vsel %vm243, %v250, 0
        %258 = vmatprep.subr.mxu0 0.0
        %259 = vmatpush1.msra.mxu0 0.0
        %260 = vmatprep.subr.mxu0 0.0
        %261 = vmatpush1.msra.mxu0 0.0
        %262 = vmatprep.subr.mxu0 0.0
        %263 = vmatpush1.msra.mxu0 0.0
        %264 = vmatprep.subr.mxu0 0.0
        %265 = vmatpush1.msra.mxu0 0.0
        %266 = vmatprep.subr.mxu0 0.0
        %267 = vmatpush1.msra.mxu0 0.0
        %268 = vmatprep.subr.mxu0 0.0
        %269 = vmatpush1.msra.mxu0 0.0
        %270 = vmatprep.subr.mxu0 0.0
        %271 = vmatpush1.msra.mxu0 0.0
        %272 = vmatprep.subr.mxu0 0.0
        %273 = vmatpush1.msra.mxu0 0.0
        %274 = vmatprep.subr.mxu0 0.0
        %275 = vmatpush1.msra.mxu0 0.0
        %276 = vmatprep.subr.mxu0 0.0
        %277 = vmatpush1.msra.mxu0 0.0
        %278 = vmatprep.subr.mxu0 0.0
        %279 = vmatpush1.msra.mxu0 0.0
        %280 = vmatprep.subr.mxu0 0.0
        %281 = vmatpush1.msra.mxu0 0.0
        %282 = vmatprep.subr.mxu0 0.0
        %283 = vmatpush1.msra.mxu0 %v254
        %284 = vmatprep.subr.mxu0 0.0
        %285 = vmatpush1.msra.mxu0 %v253
        %286 = vmatprep.subr.mxu0 0.0
        %287 = vmatpush1.msra.mxu0 %v252
        %288 = vmatprep.subr.mxu0 0.0
        %289 = vmatpush1.msra.mxu0 %v251
        %290 = vmatprep.subr.mxu0 0.0
        %291 = vmatpush2.msra.mxu0 0.0
        %292 = vmatprep.subr.mxu0 0.0
        %293 = vmatpush2.msra.mxu0 0.0
        %294 = vmatprep.subr.mxu0 0.0
        %295 = vmatpush2.msra.mxu0 0.0
        %296 = vmatprep.subr.mxu0 0.0
        %297 = vmatpush2.msra.mxu0 0.0
        %298 = vmatprep.subr.mxu0 0.0
        %299 = vmatpush2.msra.mxu0 0.0
        %300 = vmatprep.subr.mxu0 0.0
        %301 = vmatpush2.msra.mxu0 0.0
        %302 = vmatprep.subr.mxu0 0.0
        %303 = vmatpush2.msra.mxu0 0.0
        %304 = vmatprep.subr.mxu0 0.0
        %305 = vmatpush2.msra.mxu0 0.0
        %306 = vmatprep.subr.mxu0 0.0
        %307 = vmatpush2.msra.mxu0 0.0
        %308 = vmatprep.subr.mxu0 0.0
        %309 = vmatpush2.msra.mxu0 0.0
        %310 = vmatprep.subr.mxu0 0.0
        %311 = vmatpush2.msra.mxu0 0.0
        %312 = vmatprep.subr.mxu0 0.0
        %313 = vmatpush2.msra.mxu0 0.0
        %314 = vmatprep.subr.mxu0 0.0
        %315 = vmatpush2.msra.mxu0 0.0
        %316 = vmatprep.subr.mxu0 0.0
        %317 = vmatpush2.msra.mxu0 0.0
        %318 = vmatprep.subr.mxu0 0.0
        %319 = vmatpush2.msra.mxu0 0.0
        %320 = vmatprep.subr.mxu0 0.0
        %321 = vmatpush2.msra.mxu0 0.0
        %322 = vmatprep.mubr.f32.mxu0 0.0
        %323 = vmatmul.mubr.f32.gmra.mxu0 %v256
        %v324 = vpop.f32.mrf.mxu0
        %v325 = vadd.f32 0.0, %v324
        %v326 = vpop.f32.mrf.mxu0
        %327 = vdwg.mxu0
        %v328 = vld [vmem:[%s2] sm:$0x1]
        %v329 = vsub.f32 %v328, %v325
        %v330 = vld [vmem:[#allocation5] sm:$0xff]
        %v331 = vld [vmem:[#allocation5 + $0x8] sm:$0xff]
        %v332 = vld [vmem:[#allocation5 + $0x10] sm:$0xff]
        %v333 = vld [vmem:[#allocation5 + $0x18] sm:$0xff]
        %v335 = vsel %vm243, %v242, 0
        %337 = vmatprep.subr.mxu0 0.0
        %338 = vmatpush1.msra.mxu0 0.0
        %339 = vmatprep.subr.mxu0 0.0
        %340 = vmatpush1.msra.mxu0 0.0
        %341 = vmatprep.subr.mxu0 0.0
        %342 = vmatpush1.msra.mxu0 0.0
        %343 = vmatprep.subr.mxu0 0.0
        %344 = vmatpush1.msra.mxu0 0.0
        %345 = vmatprep.subr.mxu0 0.0
        %346 = vmatpush1.msra.mxu0 0.0
        %347 = vmatprep.subr.mxu0 0.0
        %348 = vmatpush1.msra.mxu0 0.0
        %349 = vmatprep.subr.mxu0 0.0
        %350 = vmatpush1.msra.mxu0 0.0
        %351 = vmatprep.subr.mxu0 0.0
        %352 = vmatpush1.msra.mxu0 0.0
        %353 = vmatprep.subr.mxu0 0.0
        %354 = vmatpush1.msra.mxu0 0.0
        %355 = vmatprep.subr.mxu0 0.0
        %356 = vmatpush1.msra.mxu0 0.0
        %357 = vmatprep.subr.mxu0 0.0
        %358 = vmatpush1.msra.mxu0 0.0
        %359 = vmatprep.subr.mxu0 0.0
        %360 = vmatpush1.msra.mxu0 0.0
        %361 = vmatprep.subr.mxu0 0.0
        %362 = vmatpush1.msra.mxu0 %v333
        %363 = vmatprep.subr.mxu0 0.0
        %364 = vmatpush1.msra.mxu0 %v332
        %365 = vmatprep.subr.mxu0 0.0
        %366 = vmatpush1.msra.mxu0 %v331
        %367 = vmatprep.subr.mxu0 0.0
        %368 = vmatpush1.msra.mxu0 %v330
        %369 = vmatprep.subr.mxu0 0.0
        %370 = vmatpush2.msra.mxu0 0.0
        %371 = vmatprep.subr.mxu0 0.0
        %372 = vmatpush2.msra.mxu0 0.0
        %373 = vmatprep.subr.mxu0 0.0
        %374 = vmatpush2.msra.mxu0 0.0
        %375 = vmatprep.subr.mxu0 0.0
        %376 = vmatpush2.msra.mxu0 0.0
        %377 = vmatprep.subr.mxu0 0.0
        %378 = vmatpush2.msra.mxu0 0.0
        %379 = vmatprep.subr.mxu0 0.0
        %380 = vmatpush2.msra.mxu0 0.0
        %381 = vmatprep.subr.mxu0 0.0
        %382 = vmatpush2.msra.mxu0 0.0
        %383 = vmatprep.subr.mxu0 0.0
        %384 = vmatpush2.msra.mxu0 0.0
        %385 = vmatprep.subr.mxu0 0.0
        %386 = vmatpush2.msra.mxu0 0.0
        %387 = vmatprep.subr.mxu0 0.0
        %388 = vmatpush2.msra.mxu0 0.0
        %389 = vmatprep.subr.mxu0 0.0
        %390 = vmatpush2.msra.mxu0 0.0
        %391 = vmatprep.subr.mxu0 0.0
        %392 = vmatpush2.msra.mxu0 0.0
        %393 = vmatprep.subr.mxu0 0.0
        %394 = vmatpush2.msra.mxu0 0.0
        %395 = vmatprep.subr.mxu0 0.0
        %396 = vmatpush2.msra.mxu0 0.0
        %397 = vmatprep.subr.mxu0 0.0
        %398 = vmatpush2.msra.mxu0 0.0
        %399 = vmatprep.subr.mxu0 0.0
        %400 = vmatpush2.msra.mxu0 0.0
        %401 = vmatprep.mubr.f32.mxu0 0.0
        %402 = vmatmul.mubr.f32.gmra.mxu0 %v335
        %v403 = vpop.f32.mrf.mxu0
        %v404 = vadd.f32 0.0, %v403
        %v405 = vpop.f32.mrf.mxu0
        %406 = vdwg.mxu0
        %v408 = vlaneseq
        %v409 = vshrl.u32 %v408, 7
        %v410 = vsub.s32 0, %v409
        %v411 = vrot.slane %v329, %v410
        %v413 = vadd.f32 %v404, %v411
        %414 = vst.msk [vmem:[%s241] sm:$0xff] %vm243, %v413
        %s415 = sand.u32 %s119, 1
        %s416 = scalar_lea.sflag [#allocation4], %s415
        %s417 = sand.u32 %s119, 1
        %s418 = smul.addr %s417, 8
        %s419 = scalar_lea.vmem [#allocation8], %s418
        // Predicated region
        $region49: #{tpu_custom_call.1} parent=35 // pred_check
          %p420 = pneg %p129
        $region50: #{tpu_custom_call.1} parent=35 // pred_check_branch
          %422 = sbr.rel (%p420) target = $region52
        $region51: #{tpu_custom_call.1} parent=35 // pred_region
          %s424 = ssub.s32 128, 128
          %425 = vsyncadd %s416, %s424
          %s426 = smul.addr %s22, 128
          %s427 = scalar_lea.hbm %s4, %s426
          %s429 = sshll.u32 %s419, 4
          %s430 = int_to_ptr.vmem [resolvable:$true] %s429
          %432 = dma.vmem_to_hbm [thread:$0]  %s430, 128, %s427, %s416
        $region52: #{tpu_custom_call.1} parent=35 // pred_fallthru
          _
      $region36: #{tpu_custom_call.1} parent=5 // pred_fallthru
        _
      %p433 = scmp.le.s32.totalorder 2, %s17
      // Predicated region
      $region53: #{tpu_custom_call.1} parent=5 // pred_check
        %p434 = pneg %p433
      $region54: #{tpu_custom_call.1} parent=5 // pred_check_branch
        %436 = sbr.rel (%p434) target = $region56
      $region55: #{tpu_custom_call.1} parent=5 // pred_region
        %s437 = ssub.s32 %s17, 2
        // Predicated region
        $region57: #{tpu_custom_call.1} parent=55 // pred_check
          %p438 = pneg %p135
        $region58: #{tpu_custom_call.1} parent=55 // pred_check_branch
          %440 = sbr.rel (%p438) target = $region60
        $region59: #{tpu_custom_call.1} parent=55 // pred_region
          %s441 = sand.u32 %s120, 1
          %s442 = scalar_lea.sflag [#allocation4], %s441
          %s443 = sand.u32 %s120, 1
          %s444 = smul.addr %s443, 8
          %s445 = scalar_lea.vmem [#allocation8], %s444
          %446 = dma.done %s442, 128
        $region60: #{tpu_custom_call.1} parent=55 // pred_fallthru
          _
      $region56: #{tpu_custom_call.1} parent=5 // pred_fallthru
        _
    $region6: #{tpu_custom_call.1} parent=1 // loop_footer
      %s21 = sadd.s32 1, %s17
    $region7: #{tpu_custom_call.1} parent=1 // loop_footer_branch
      %16 = sbr.rel target = $region3
    $region8: #{tpu_custom_call.1} parent=1 // loop_exit
      _
    %447 = vsyncpa [#allocation3], 1
    %s448 = scalar_lea.sflag [#allocation3], 1
    %449 = vsyncpa %s448, 1
    %450 = vsyncpa [#allocation6], 1
    %451 = vsyncpa [#allocation4], 1
    %s452 = scalar_lea.sflag [#allocation4], 1
    %453 = vsyncpa %s452, 1

</llo_original>
